<compile_context>
chip_gen: v6e
topology: v6e:2x2x1
jax: 0.10.0
libtpu: 0.0.40
codegen_flags: <defaults>
</compile_context>

<pallas_src>
import jax
import jax.numpy as jnp
from jax.experimental import pallas as pl
from jax.experimental.pallas import tpu as pltpu

_LANES = 128     # vreg lane width   (last dim)
_SUBLANES = 8    # vreg sublane width (second-to-last dim)


def _round_up(n, m):
    return ((n + m - 1) // m) * m


def linear_relu_kernel(x_ref, w_ref, b_ref, o_ref):
    x = x_ref[...]
    w = w_ref[...]
    if x.dtype != w.dtype:
        # bf16 fast path: cast the activation on the VPU right before the MXU push;
        # this is hidden under the DMA instead of being a separate HBM pass.
        x = x.astype(w.dtype)
    acc = jnp.dot(x, w, preferred_element_type=jnp.float32)   # MXU, f32 accumulate
    acc = acc + b_ref[...]                                     # (1, out_dim) broadcast
    o_ref[...] = jnp.maximum(acc, 0.0).astype(o_ref.dtype)     # f32 epilogue (v5e-safe)


def preprocess_params(w, b, *, use_bf16_matmul=False):
    """One-time parameter prep — hoist OUT of the per-call / per-step path.

    Optionally casts W to bf16 for the MXU fast path (halves weight bytes; useful on
    v5e/v6e/v7x alike since accumulation and the bias+relu epilogue stay f32), and
    reshapes the bias to (1, out_dim) f32 for the kernel's broadcast add.
    """
    w_p = w.astype(jnp.bfloat16) if use_bf16_matmul else w
    b_p = jnp.asarray(b, jnp.float32).reshape(1, -1)
    return w_p, b_p


def my_network_block(x, w, b, *, block_rows=2048):
    """relu(x @ w + b).

    x: (B, in_dim) f32.  w: (in_dim, out_dim) f32 or bf16 (preprocess_params).
    b: (out_dim,) or (1, out_dim) f32.
    block_rows: batch tile for the pipelined 1-D grid (2048 suits v7x; 512-1024
                already hits ~85% of HBM roofline on v6e).
    """
    B, in_dim = x.shape
    k_w, out_dim = w.shape
    assert k_w == in_dim, "weight contraction dim must match x"
    out_dtype = x.dtype

    if b.ndim == 1:                       # accept a raw (out_dim,) bias too
        b = b.reshape(1, out_dim)
    if b.dtype != jnp.float32:
        b = b.astype(jnp.float32)

    # --- Batch tiling (1-D grid; W / bias resident) --------------------------
    m_rows = _round_up(B, _SUBLANES)
    tm = min(m_rows, _round_up(block_rows, _SUBLANES))
    # Mid/large batches: cap the tile at half the batch so the grid has >=2
    # "parallel" steps and can actually shard across v7x's two TensorCores.
    if m_rows >= 512 and tm >= m_rows:
        tm = _round_up((m_rows + 1) // 2, _SUBLANES)
    m_pad = _round_up(B, tm)
    x_p = x if m_pad == B else jnp.pad(x, ((0, m_pad - B), (0, 0)))
    grid = (m_pad // tm,)

    # --- VMEM budget (true tile footprint incl. VMEM lane padding) -----------
    it_x = jnp.dtype(x.dtype).itemsize
    it_w = jnp.dtype(w.dtype).itemsize
    it_o = jnp.dtype(out_dtype).itemsize
    n_lanes = _round_up(out_dim, _LANES)              # VMEM pads narrow last dims
    vmem_step = (2 * tm * in_dim * it_x               # double-buffered x tiles
                 + 2 * tm * n_lanes * it_o            # double-buffered out tiles
                 + 2 * in_dim * n_lanes * it_w        # resident W (default 2 bufs)
                 + 2 * _SUBLANES * n_lanes * 4)       # resident bias
    vmem_limit = int(min(64 << 20, max(2 * vmem_step, 16 << 20)))  # <= v7x physical

    out = pl.pallas_call(
        linear_relu_kernel,
        out_shape=jax.ShapeDtypeStruct((m_pad, out_dim), out_dtype),
        grid_spec=pltpu.PrefetchScalarGridSpec(
            num_scalar_prefetch=0,
            grid=grid,
            in_specs=[
                pl.BlockSpec((tm, in_dim), lambda i: (i, 0)),       # x tile, pipelined
                pl.BlockSpec((in_dim, out_dim), lambda i: (0, 0)),  # W, full array, resident
                pl.BlockSpec((1, out_dim), lambda i: (0, 0)),       # bias, resident
            ],
            out_specs=pl.BlockSpec((tm, out_dim), lambda i: (i, 0)),
        ),
        compiler_params=pltpu.CompilerParams(
            dimension_semantics=("parallel",),   # shards batch tiles across TCs when grid >= 2
            vmem_limit_bytes=vmem_limit,
        ),
        cost_estimate=pl.CostEstimate(
            flops=2 * B * in_dim * out_dim,
            transcendentals=0,
            bytes_accessed=(B * in_dim * it_x + in_dim * out_dim * it_w
                            + out_dim * 4 + B * out_dim * it_o),
        ),
    )(x_p, w, b)

    return out if m_pad == B else out[:B]


if __name__ == "__main__":
    in_dim = 512
    out_dim = 10
    batch_size = 32

    key = jax.random.PRNGKey(0)
    kx, kw, kb = jax.random.split(key, 3)

    # Input, mirroring torch.randn(batch_size, in_dim)
    x = jax.random.normal(kx, (batch_size, in_dim), dtype=jnp.float32)

    # Params matching torch.nn.Linear's U(-1/sqrt(in), 1/sqrt(in)) init
    bound = 1.0 / jnp.sqrt(jnp.float32(in_dim))
    w = jax.random.uniform(kw, (in_dim, out_dim), jnp.float32, -bound, bound)
    b = jax.random.uniform(kb, (out_dim,), jnp.float32, -bound, bound)

    ref = jnp.maximum(x @ w + b, 0.0)

    # f32 path: matches the PyTorch module's numerics exactly.
    w_f32, b_p = preprocess_params(w, b)
    out = jax.block_until_ready(my_network_block(x, w_f32, b_p))
    assert out.shape == (batch_size, out_dim)
    assert jnp.allclose(out, ref, atol=1e-5, rtol=1e-5)

    # bf16 MXU-operand path (W cast once, outside the call; x cast in-kernel).
    w_bf16, b_p16 = preprocess_params(w, b, use_bf16_matmul=True)
    out_bf16 = jax.block_until_ready(my_network_block(x, w_bf16, b_p16))
    assert out_bf16.shape == (batch_size, out_dim)
    assert jnp.allclose(out_bf16, ref, atol=5e-2, rtol=5e-2)

    print("KERNEL_OK")
</pallas_src>

<mosaic_0001>
module attributes {stable_mosaic.version = 11 : i64} {
  func.func @linear_relu_kernel(%arg0: i32, %arg1: memref<32x512xf32, #tpu.memory_space<vmem>>, %arg2: memref<512x10xf32, #tpu.memory_space<vmem>>, %arg3: memref<1x10xf32, #tpu.memory_space<vmem>>, %arg4: memref<32x10xf32, #tpu.memory_space<vmem>>) attributes {dimension_semantics = [#tpu.dimension_semantics<parallel>], iteration_bounds = array<i64: 1>, scalar_prefetch = 0 : i64, scratch_operands = 0 : i64, tpu.core_type = #tpu.core_type<tc>, window_params = [{transform_indices = @transform_0, window_bounds = array<i64: 32, 512>}, {pipeline_mode = #tpu.pipeline_mode<synchronous>, transform_indices = @transform_1, window_bounds = array<i64: 512, 10>}, {pipeline_mode = #tpu.pipeline_mode<synchronous>, transform_indices = @transform_2, window_bounds = array<i64: 1, 10>}, {transform_indices = @transform_3, window_bounds = array<i64: 32, 10>}]} {
    %c0 = arith.constant 0 : index
    %c0_0 = arith.constant 0 : index
    %0 = vector.load %arg1[%c0, %c0_0] : memref<32x512xf32, #tpu.memory_space<vmem>>, vector<32x512xf32>
    %c0_1 = arith.constant 0 : index
    %c0_2 = arith.constant 0 : index
    %1 = vector.load %arg2[%c0_1, %c0_2] : memref<512x10xf32, #tpu.memory_space<vmem>>, vector<512x10xf32>
    %cst = arith.constant dense<0.000000e+00> : vector<32x10xf32>
    %2 = tpu.matmul %0, %1, %cst {dimension_numbers = #tpu.dot_dimension_numbers<[1], [0], [0], [1], [0, 0, 1, 1], [], []>} : vector<32x512xf32>, vector<512x10xf32>, vector<32x10xf32> -> vector<32x10xf32>
    %c0_3 = arith.constant 0 : index
    %c0_4 = arith.constant 0 : index
    %3 = vector.load %arg3[%c0_3, %c0_4] : memref<1x10xf32, #tpu.memory_space<vmem>>, vector<1x10xf32>
    %4 = vector.broadcast %3 : vector<1x10xf32> to vector<32x10xf32>
    %5 = arith.addf %2, %4 : vector<32x10xf32>
    %cst_5 = arith.constant 0.000000e+00 : f32
    %6 = vector.broadcast %cst_5 : f32 to vector<32x10xf32>
    %7 = arith.maximumf %5, %6 : vector<32x10xf32>
    %c0_6 = arith.constant 0 : index
    %c0_7 = arith.constant 0 : index
    %8 = vector.load %arg4[%c0_6, %c0_7] : memref<32x10xf32, #tpu.memory_space<vmem>>, vector<32x10xf32>
    tpu.vector_store %arg4[%c0_6, %c0_7], %7 {strides = array<i32>} : memref<32x10xf32, #tpu.memory_space<vmem>>, vector<32x10xf32>,
    return
  }
  func.func @transform_0(%arg0: i32) -> (i32, i32) {
    %c0_i32 = arith.constant 0 : i32
    %c0_i32_0 = arith.constant 0 : i32
    return %arg0, %c0_i32 : i32, i32
  }
  func.func @transform_1(%arg0: i32) -> (i32, i32) {
    %c0_i32 = arith.constant 0 : i32
    %c0_i32_0 = arith.constant 0 : i32
    %c0_i32_1 = arith.constant 0 : i32
    return %c0_i32, %c0_i32_0 : i32, i32
  }
  func.func @transform_2(%arg0: i32) -> (i32, i32) {
    %c0_i32 = arith.constant 0 : i32
    %c0_i32_0 = arith.constant 0 : i32
    %c0_i32_1 = arith.constant 0 : i32
    return %c0_i32, %c0_i32_0 : i32, i32
  }
  func.func @transform_3(%arg0: i32) -> (i32, i32) {
    %c0_i32 = arith.constant 0 : i32
    %c0_i32_0 = arith.constant 0 : i32
    return %arg0, %c0_i32 : i32, i32
  }
}

</mosaic_0001>

<llo_original>
// kernel: tpu_custom_call.1
$region0: #{tpu_custom_call.1}
  #allocation0 [shape = 'u32[]', space=smem, size = 0x4, offset = 0x4, fixed_abs, tag = 'smem constant byte address 0x4 - core index']
  #allocation1 [shape = 'u32[144,128]{1,0:T(1,128)}', space=vmem, size = 0x12000, scoped, tag = 'internal scratch']
  %s0 = inlined_call_operand.vmem [shape: f32[32,512], index: 0, kind: input, shape index: {}]
  %s1 = inlined_call_operand.vmem [shape: f32[512,10], index: 1, kind: input, shape index: {}]
  %s2 = inlined_call_operand.vmem [shape: f32[1,10], index: 2, kind: input, shape index: {}]
  %s3 = inlined_call_operand.vmem [shape: f32[32,10], index: 3, kind: output, shape index: {}]
  %s4 = sld [smem:[#allocation0]]
  $region22: #{tpu_custom_call.1} parent=0
    _
  %s6 = ssub.s32 1, %s4
  %s7 = scalar_select 0, %s6, %s4
  // Predicated region
  $region2: #{tpu_custom_call.1} parent=0 // pred_check
    _
  $region3: #{tpu_custom_call.1} parent=0 // pred_check_branch
    %9 = sbr.rel (0) target = $region5
  $region4: #{tpu_custom_call.1} parent=0 // pred_region
    _
  $region5: #{tpu_custom_call.1} parent=0 // pred_fallthru
    _
  // Predicated region
  $region6: #{tpu_custom_call.1} parent=0 // pred_check
    _
  $region7: #{tpu_custom_call.1} parent=0 // pred_check_branch
    %11 = sbr.rel (0) target = $region9
  $region8: #{tpu_custom_call.1} parent=0 // pred_region
    _
  $region9: #{tpu_custom_call.1} parent=0 // pred_fallthru
    _
  // Predicated region
  $region10: #{tpu_custom_call.1} parent=0 // pred_check
    _
  $region11: #{tpu_custom_call.1} parent=0 // pred_check_branch
    %13 = sbr.rel (0) target = $region13
  $region12: #{tpu_custom_call.1} parent=0 // pred_region
    _
  $region13: #{tpu_custom_call.1} parent=0 // pred_fallthru
    _
  %v14 = vld [vmem:[%s0] sm:$0xff]
  %v15 = vld [vmem:[%s0 + $0x8] sm:$0xff]
  %v16 = vld [vmem:[%s0 + $0x10] sm:$0xff]
  %v17 = vld [vmem:[%s0 + $0x18] sm:$0xff]
  %v18 = vld [vmem:[%s0 + $0x20] sm:$0xff]
  %v19 = vld [vmem:[%s0 + $0x28] sm:$0xff]
  %v20 = vld [vmem:[%s0 + $0x30] sm:$0xff]
  %v21 = vld [vmem:[%s0 + $0x38] sm:$0xff]
  %v22 = vld [vmem:[%s0 + $0x40] sm:$0xff]
  %v23 = vld [vmem:[%s0 + $0x48] sm:$0xff]
  %v24 = vld [vmem:[%s0 + $0x50] sm:$0xff]
  %v25 = vld [vmem:[%s0 + $0x58] sm:$0xff]
  %v26 = vld [vmem:[%s0 + $0x60] sm:$0xff]
  %v27 = vld [vmem:[%s0 + $0x68] sm:$0xff]
  %v28 = vld [vmem:[%s0 + $0x70] sm:$0xff]
  %v29 = vld [vmem:[%s0 + $0x78] sm:$0xff]
  %v30 = vld [vmem:[%s1] sm:$0xff]
  %v31 = vld [vmem:[%s1 + $0x8] sm:$0xff]
  %v32 = vld [vmem:[%s1 + $0x10] sm:$0xff]
  %v33 = vld [vmem:[%s1 + $0x18] sm:$0xff]
  %v34 = vld [vmem:[%s1 + $0x20] sm:$0xff]
  %v35 = vld [vmem:[%s1 + $0x28] sm:$0xff]
  %v36 = vld [vmem:[%s1 + $0x30] sm:$0xff]
  %v37 = vld [vmem:[%s1 + $0x38] sm:$0xff]
  %v38 = vld [vmem:[%s1 + $0x40] sm:$0xff]
  %v39 = vld [vmem:[%s1 + $0x48] sm:$0xff]
  %v40 = vld [vmem:[%s1 + $0x50] sm:$0xff]
  %v41 = vld [vmem:[%s1 + $0x58] sm:$0xff]
  %v42 = vld [vmem:[%s1 + $0x60] sm:$0xff]
  %v43 = vld [vmem:[%s1 + $0x68] sm:$0xff]
  %v44 = vld [vmem:[%s1 + $0x70] sm:$0xff]
  %v45 = vld [vmem:[%s1 + $0x78] sm:$0xff]
  %v46 = vld [vmem:[%s1 + $0x80] sm:$0xff]
  %v47 = vld [vmem:[%s1 + $0x88] sm:$0xff]
  %v48 = vld [vmem:[%s1 + $0x90] sm:$0xff]
  %v49 = vld [vmem:[%s1 + $0x98] sm:$0xff]
  %v50 = vld [vmem:[%s1 + $0xa0] sm:$0xff]
  %v51 = vld [vmem:[%s1 + $0xa8] sm:$0xff]
  %v52 = vld [vmem:[%s1 + $0xb0] sm:$0xff]
  %v53 = vld [vmem:[%s1 + $0xb8] sm:$0xff]
  %v54 = vld [vmem:[%s1 + $0xc0] sm:$0xff]
  %v55 = vld [vmem:[%s1 + $0xc8] sm:$0xff]
  %v56 = vld [vmem:[%s1 + $0xd0] sm:$0xff]
  %v57 = vld [vmem:[%s1 + $0xd8] sm:$0xff]
  %v58 = vld [vmem:[%s1 + $0xe0] sm:$0xff]
  %v59 = vld [vmem:[%s1 + $0xe8] sm:$0xff]
  %v60 = vld [vmem:[%s1 + $0xf0] sm:$0xff]
  %v61 = vld [vmem:[%s1 + $0xf8] sm:$0xff]
  %v62 = vld [vmem:[%s1 + $0x100] sm:$0xff]
  %v63 = vld [vmem:[%s1 + $0x108] sm:$0xff]
  %v64 = vld [vmem:[%s1 + $0x110] sm:$0xff]
  %v65 = vld [vmem:[%s1 + $0x118] sm:$0xff]
  %v66 = vld [vmem:[%s1 + $0x120] sm:$0xff]
  %v67 = vld [vmem:[%s1 + $0x128] sm:$0xff]
  %v68 = vld [vmem:[%s1 + $0x130] sm:$0xff]
  %v69 = vld [vmem:[%s1 + $0x138] sm:$0xff]
  %v70 = vld [vmem:[%s1 + $0x140] sm:$0xff]
  %v71 = vld [vmem:[%s1 + $0x148] sm:$0xff]
  %v72 = vld [vmem:[%s1 + $0x150] sm:$0xff]
  %v73 = vld [vmem:[%s1 + $0x158] sm:$0xff]
  %v74 = vld [vmem:[%s1 + $0x160] sm:$0xff]
  %v75 = vld [vmem:[%s1 + $0x168] sm:$0xff]
  %v76 = vld [vmem:[%s1 + $0x170] sm:$0xff]
  %v77 = vld [vmem:[%s1 + $0x178] sm:$0xff]
  %v78 = vld [vmem:[%s1 + $0x180] sm:$0xff]
  %v79 = vld [vmem:[%s1 + $0x188] sm:$0xff]
  %v80 = vld [vmem:[%s1 + $0x190] sm:$0xff]
  %v81 = vld [vmem:[%s1 + $0x198] sm:$0xff]
  %v82 = vld [vmem:[%s1 + $0x1a0] sm:$0xff]
  %v83 = vld [vmem:[%s1 + $0x1a8] sm:$0xff]
  %v84 = vld [vmem:[%s1 + $0x1b0] sm:$0xff]
  %v85 = vld [vmem:[%s1 + $0x1b8] sm:$0xff]
  %v86 = vld [vmem:[%s1 + $0x1c0] sm:$0xff]
  %v87 = vld [vmem:[%s1 + $0x1c8] sm:$0xff]
  %v88 = vld [vmem:[%s1 + $0x1d0] sm:$0xff]
  %v89 = vld [vmem:[%s1 + $0x1d8] sm:$0xff]
  %v90 = vld [vmem:[%s1 + $0x1e0] sm:$0xff]
  %v91 = vld [vmem:[%s1 + $0x1e8] sm:$0xff]
  %v92 = vld [vmem:[%s1 + $0x1f0] sm:$0xff]
  %v93 = vld [vmem:[%s1 + $0x1f8] sm:$0xff]
  %v94 = vld [vmem:[%s2] sm:$0x1]
  %v96 = vlaneseq
  %v97 = vshrl.u32 %v96, 7
  %v98 = vsub.s32 0, %v97
  %v99 = vrot.slane %v94, %v98
  %101 = vmatprep.subr.mxu0 0.0
  %102 = vmatpush1.msra.mxu0 %v45
  %103 = vmatprep.subr.mxu0 0.0
  %104 = vmatpush1.msra.mxu0 %v44
  %105 = vmatprep.subr.mxu0 0.0
  %106 = vmatpush1.msra.mxu0 %v43
  %107 = vmatprep.subr.mxu0 0.0
  %108 = vmatpush1.msra.mxu0 %v42
  %109 = vmatprep.subr.mxu0 0.0
  %110 = vmatpush1.msra.mxu0 %v41
  %111 = vmatprep.subr.mxu0 0.0
  %112 = vmatpush1.msra.mxu0 %v40
  %113 = vmatprep.subr.mxu0 0.0
  %114 = vmatpush1.msra.mxu0 %v39
  %115 = vmatprep.subr.mxu0 0.0
  %116 = vmatpush1.msra.mxu0 %v38
  %117 = vmatprep.subr.mxu0 0.0
  %118 = vmatpush1.msra.mxu0 %v37
  %119 = vmatprep.subr.mxu0 0.0
  %120 = vmatpush1.msra.mxu0 %v36
  %121 = vmatprep.subr.mxu0 0.0
  %122 = vmatpush1.msra.mxu0 %v35
  %123 = vmatprep.subr.mxu0 0.0
  %124 = vmatpush1.msra.mxu0 %v34
  %125 = vmatprep.subr.mxu0 0.0
  %126 = vmatpush1.msra.mxu0 %v33
  %127 = vmatprep.subr.mxu0 0.0
  %128 = vmatpush1.msra.mxu0 %v32
  %129 = vmatprep.subr.mxu0 0.0
  %130 = vmatpush1.msra.mxu0 %v31
  %131 = vmatprep.subr.mxu0 0.0
  %132 = vmatpush1.msra.mxu0 %v30
  %133 = vmatprep.subr.mxu0 0.0
  %134 = vmatpush2.msra.mxu0 %v61
  %135 = vmatprep.subr.mxu0 0.0
  %136 = vmatpush2.msra.mxu0 %v60
  %137 = vmatprep.subr.mxu0 0.0
  %138 = vmatpush2.msra.mxu0 %v59
  %139 = vmatprep.subr.mxu0 0.0
  %140 = vmatpush2.msra.mxu0 %v58
  %141 = vmatprep.subr.mxu0 0.0
  %142 = vmatpush2.msra.mxu0 %v57
  %143 = vmatprep.subr.mxu0 0.0
  %144 = vmatpush2.msra.mxu0 %v56
  %145 = vmatprep.subr.mxu0 0.0
  %146 = vmatpush2.msra.mxu0 %v55
  %147 = vmatprep.subr.mxu0 0.0
  %148 = vmatpush2.msra.mxu0 %v54
  %149 = vmatprep.subr.mxu0 0.0
  %150 = vmatpush2.msra.mxu0 %v53
  %151 = vmatprep.subr.mxu0 0.0
  %152 = vmatpush2.msra.mxu0 %v52
  %153 = vmatprep.subr.mxu0 0.0
  %154 = vmatpush2.msra.mxu0 %v51
  %155 = vmatprep.subr.mxu0 0.0
  %156 = vmatpush2.msra.mxu0 %v50
  %157 = vmatprep.subr.mxu0 0.0
  %158 = vmatpush2.msra.mxu0 %v49
  %159 = vmatprep.subr.mxu0 0.0
  %160 = vmatpush2.msra.mxu0 %v48
  %161 = vmatprep.subr.mxu0 0.0
  %162 = vmatpush2.msra.mxu0 %v47
  %163 = vmatprep.subr.mxu0 0.0
  %164 = vmatpush2.msra.mxu0 %v46
  %165 = vmatprep.mubr.f32.mxu0 %v15
  %166 = vmatmul.mubr.f32.gmra.mxu0 %v14
  %v167 = vpop.f32.mrf.mxu0
  %v168 = vadd.f32 %v99, %v167
  %v169 = vpop.f32.mrf.mxu0
  %170 = vmatprep.mubr.f32.mxu0 %v19
  %171 = vmatmul.mubr.f32.gmra.mxu0 %v18
  %v172 = vpop.f32.mrf.mxu0
  %v173 = vadd.f32 %v99, %v172
  %v174 = vpop.f32.mrf.mxu0
  %175 = vmatprep.mubr.f32.mxu0 %v23
  %176 = vmatmul.mubr.f32.gmra.mxu0 %v22
  %v177 = vpop.f32.mrf.mxu0
  %v178 = vadd.f32 %v99, %v177
  %v179 = vpop.f32.mrf.mxu0
  %180 = vmatprep.mubr.f32.mxu0 %v27
  %181 = vmatmul.mubr.f32.gmra.mxu0 %v26
  %v182 = vpop.f32.mrf.mxu0
  %v183 = vadd.f32 %v99, %v182
  %v184 = vpop.f32.mrf.mxu0
  %185 = vdwg.mxu0
  %186 = vmatprep.subr.mxu0 0.0
  %187 = vmatpush1.msra.mxu0 %v77
  %188 = vmatprep.subr.mxu0 0.0
  %189 = vmatpush1.msra.mxu0 %v76
  %190 = vmatprep.subr.mxu0 0.0
  %191 = vmatpush1.msra.mxu0 %v75
  %192 = vmatprep.subr.mxu0 0.0
  %193 = vmatpush1.msra.mxu0 %v74
  %194 = vmatprep.subr.mxu0 0.0
  %195 = vmatpush1.msra.mxu0 %v73
  %196 = vmatprep.subr.mxu0 0.0
  %197 = vmatpush1.msra.mxu0 %v72
  %198 = vmatprep.subr.mxu0 0.0
  %199 = vmatpush1.msra.mxu0 %v71
  %200 = vmatprep.subr.mxu0 0.0
  %201 = vmatpush1.msra.mxu0 %v70
  %202 = vmatprep.subr.mxu0 0.0
  %203 = vmatpush1.msra.mxu0 %v69
  %204 = vmatprep.subr.mxu0 0.0
  %205 = vmatpush1.msra.mxu0 %v68
  %206 = vmatprep.subr.mxu0 0.0
  %207 = vmatpush1.msra.mxu0 %v67
  %208 = vmatprep.subr.mxu0 0.0
  %209 = vmatpush1.msra.mxu0 %v66
  %210 = vmatprep.subr.mxu0 0.0
  %211 = vmatpush1.msra.mxu0 %v65
  %212 = vmatprep.subr.mxu0 0.0
  %213 = vmatpush1.msra.mxu0 %v64
  %214 = vmatprep.subr.mxu0 0.0
  %215 = vmatpush1.msra.mxu0 %v63
  %216 = vmatprep.subr.mxu0 0.0
  %217 = vmatpush1.msra.mxu0 %v62
  %218 = vmatprep.subr.mxu0 0.0
  %219 = vmatpush2.msra.mxu0 %v93
  %220 = vmatprep.subr.mxu0 0.0
  %221 = vmatpush2.msra.mxu0 %v92
  %222 = vmatprep.subr.mxu0 0.0
  %223 = vmatpush2.msra.mxu0 %v91
  %224 = vmatprep.subr.mxu0 0.0
  %225 = vmatpush2.msra.mxu0 %v90
  %226 = vmatprep.subr.mxu0 0.0
  %227 = vmatpush2.msra.mxu0 %v89
  %228 = vmatprep.subr.mxu0 0.0
  %229 = vmatpush2.msra.mxu0 %v88
  %230 = vmatprep.subr.mxu0 0.0
  %231 = vmatpush2.msra.mxu0 %v87
  %232 = vmatprep.subr.mxu0 0.0
  %233 = vmatpush2.msra.mxu0 %v86
  %234 = vmatprep.subr.mxu0 0.0
  %235 = vmatpush2.msra.mxu0 %v85
  %236 = vmatprep.subr.mxu0 0.0
  %237 = vmatpush2.msra.mxu0 %v84
  %238 = vmatprep.subr.mxu0 0.0
  %239 = vmatpush2.msra.mxu0 %v83
  %240 = vmatprep.subr.mxu0 0.0
  %241 = vmatpush2.msra.mxu0 %v82
  %242 = vmatprep.subr.mxu0 0.0
  %243 = vmatpush2.msra.mxu0 %v81
  %244 = vmatprep.subr.mxu0 0.0
  %245 = vmatpush2.msra.mxu0 %v80
  %246 = vmatprep.subr.mxu0 0.0
  %247 = vmatpush2.msra.mxu0 %v79
  %248 = vmatprep.subr.mxu0 0.0
  %249 = vmatpush2.msra.mxu0 %v78
  %250 = vmatprep.mubr.f32.mxu0 %v17
  %251 = vmatmul.mubr.f32.gmra.mxu0 %v16
  %v252 = vpop.f32.mrf.mxu0
  %v253 = vadd.f32 %v168, %v252
  %v254 = vpop.f32.mrf.mxu0
  %255 = vmatprep.mubr.f32.mxu0 %v21
  %256 = vmatmul.mubr.f32.gmra.mxu0 %v20
  %v257 = vpop.f32.mrf.mxu0
  %v258 = vadd.f32 %v173, %v257
  %v259 = vpop.f32.mrf.mxu0
  %260 = vmatprep.mubr.f32.mxu0 %v25
  %261 = vmatmul.mubr.f32.gmra.mxu0 %v24
  %v262 = vpop.f32.mrf.mxu0
  %v263 = vadd.f32 %v178, %v262
  %v264 = vpop.f32.mrf.mxu0
  %265 = vmatprep.mubr.f32.mxu0 %v29
  %266 = vmatmul.mubr.f32.gmra.mxu0 %v28
  %v267 = vpop.f32.mrf.mxu0
  %v268 = vadd.f32 %v183, %v267
  %v269 = vpop.f32.mrf.mxu0
  %270 = vdwg.mxu0
  %v271 = vmax.f32 %v253, 0.0
  %v272 = vmax.f32 %v258, 0.0
  %v273 = vmax.f32 %v263, 0.0
  %v274 = vmax.f32 %v268, 0.0
  %vm275 = vcmask 80896
  %276 = vst.msk [vmem:[%s3] sm:$0xff] %vm275, %v271
  %277 = vst.msk [vmem:[%s3 + $0x8] sm:$0xff] %vm275, %v272
  %278 = vst.msk [vmem:[%s3 + $0x10] sm:$0xff] %vm275, %v273
  %279 = vst.msk [vmem:[%s3 + $0x18] sm:$0xff] %vm275, %v274
  // Predicated region
  $region14: #{tpu_custom_call.1} parent=0 // pred_check
    _
  $region15: #{tpu_custom_call.1} parent=0 // pred_check_branch
    %281 = sbr.rel (0) target = $region17
  $region16: #{tpu_custom_call.1} parent=0 // pred_region
    _
  $region17: #{tpu_custom_call.1} parent=0 // pred_fallthru
    _
  // Predicated region
  $region18: #{tpu_custom_call.1} parent=0 // pred_check
    _
  $region19: #{tpu_custom_call.1} parent=0 // pred_check_branch
    %283 = sbr.rel (0) target = $region21
  $region20: #{tpu_custom_call.1} parent=0 // pred_region
    _
  $region21: #{tpu_custom_call.1} parent=0 // pred_fallthru
    _

</llo_original>
